<compile_context>
chip_gen: v7x
topology: tpu7x:2x2x1
jax: 0.10.0
libtpu: 0.0.40
codegen_flags: <defaults>
</compile_context>

<pallas_src>
import jax
import jax.numpy as jnp
from jax.experimental import pallas as pl
from jax.experimental.pallas import tpu as pltpu


def _round_up(x, m):
    return ((x + m - 1) // m) * m


# ---------------------------------------------------------------------------
# Single-client forward (matches FedRecClient.forward exactly).
# ---------------------------------------------------------------------------
def _score_kernel(user_ref, items_ref, out_ref):
    # user_ref: (1, D) VMEM, resident across tiles.
    # items_ref: (TN, D) item tile, pipelined from HBM.
    # out_ref: (1, TN) f32, lane-dense store.
    u = user_ref[...].astype(jnp.float32)        # (1, D)
    x = items_ref[...].astype(jnp.float32)       # (TN, D)
    # Contract over D on the MXU -> (1, TN); lane-dense result, no relayout.
    out_ref[...] = jax.lax.dot_general(
        u, x,
        dimension_numbers=(((1,), (1,)), ((), ())),
        preferred_element_type=jnp.float32,
    )


def fedrec_forward(user_emb, items_emb, *, tn_max=2048):
    """scores = sum(user_emb * items_emb, axis=-1) on TPU via Pallas.

    user_emb:  (1, D) float32 or bfloat16
    items_emb: (N, D) float32 or bfloat16
    returns:   (N,)  float32
    """
    N, D = items_emb.shape
    assert user_emb.shape == (1, D)

    # Lane-dense item tiles: TN is a multiple of 128; pad the remainder in the
    # wrapper so every output block is a full-width, unmasked store.
    TN = min(tn_max, _round_up(N, 128))
    N_pad = _round_up(N, TN)
    if N_pad != N:
        items_emb = jnp.pad(items_emb, ((0, N_pad - N), (0, 0)))

    scores = pl.pallas_call(
        _score_kernel,
        out_shape=jax.ShapeDtypeStruct((1, N_pad), jnp.float32),
        grid_spec=pl.GridSpec(
            grid=(N_pad // TN,),
            in_specs=[
                pl.BlockSpec((1, D), lambda i: (0, 0)),   # user emb, resident
                pl.BlockSpec((TN, D), lambda i: (i, 0)),  # item tile, pipelined
            ],
            out_specs=pl.BlockSpec((1, TN), lambda i: (0, i)),
        ),
        compiler_params=pltpu.CompilerParams(
            dimension_semantics=("parallel",),  # shard tiles across TCs (v7x)
        ),
    )(user_emb, items_emb)
    return scores[0, :N]


# ---------------------------------------------------------------------------
# Batched forward: score C clients against N items in one launch.
# out[c, n] = sum_d user_embs[c, d] * items_emb[n, d]
# ---------------------------------------------------------------------------
def _batched_score_kernel(users_ref, items_ref, out_ref):
    u = users_ref[...].astype(jnp.float32)       # (TC, D)
    x = items_ref[...].astype(jnp.float32)       # (TN, D)
    out_ref[...] = jax.lax.dot_general(
        u, x,
        dimension_numbers=(((1,), (1,)), ((), ())),
        preferred_element_type=jnp.float32,
    )                                            # (TC, TN), lane-dense


def fedrec_forward_batched(user_embs, items_emb, *, tn_max=2048, tc_max=256):
    """Scores for many clients in a single pallas_call.

    user_embs: (C, D)   items_emb: (N, D)   ->   (C, N) float32
    """
    C, D = user_embs.shape
    N, D2 = items_emb.shape
    assert D == D2

    TC = min(tc_max, _round_up(C, 8))
    TN = min(tn_max, _round_up(N, 128))
    C_pad = _round_up(C, TC)
    N_pad = _round_up(N, TN)
    if C_pad != C:
        user_embs = jnp.pad(user_embs, ((0, C_pad - C), (0, 0)))
    if N_pad != N:
        items_emb = jnp.pad(items_emb, ((0, N_pad - N), (0, 0)))

    scores = pl.pallas_call(
        _batched_score_kernel,
        out_shape=jax.ShapeDtypeStruct((C_pad, N_pad), jnp.float32),
        grid_spec=pl.GridSpec(
            grid=(C_pad // TC, N_pad // TN),
            in_specs=[
                pl.BlockSpec((TC, D), lambda ci, ni: (ci, 0)),
                pl.BlockSpec((TN, D), lambda ci, ni: (ni, 0)),
            ],
            out_specs=pl.BlockSpec((TC, TN), lambda ci, ni: (ci, ni)),
        ),
        compiler_params=pltpu.CompilerParams(
            dimension_semantics=("parallel", "parallel"),
        ),
    )(user_embs, items_emb)
    return scores[:C, :N]


def fedrec_forward_ref(user_emb, items_emb):
    # Pure-JAX reference matching the PyTorch semantics.
    return jnp.sum(user_emb.astype(jnp.float32) * items_emb.astype(jnp.float32),
                   axis=-1)


if __name__ == "__main__":
    # Small shapes consistent with the module: dim = args.dim, N items to score.
    N = 128          # e.g. len(train_all) or a scored item subset
    DIM = 32         # args.dim
    C = 4            # number of clients for the fused batched variant

    key = jax.random.PRNGKey(0)
    k_user, k_items, k_users = jax.random.split(key, 3)

    # nn.Embedding(1, dim) with normal_(std=0.01) init, deterministic here.
    user_emb = (0.01 * jax.random.normal(k_user, (1, DIM))).astype(jnp.float32)
    # items_emb is supplied by the server in the original code; synthesize it.
    items_emb = jax.random.normal(k_items, (N, DIM)).astype(jnp.float32)
    # Multiple clients' user embeddings for the batched launch.
    user_embs = (0.01 * jax.random.normal(k_users, (C, DIM))).astype(jnp.float32)

    # Single-client forward (the module's forward).
    scores = jax.block_until_ready(fedrec_forward(user_emb, items_emb))
    ref = fedrec_forward_ref(user_emb, items_emb)
    assert scores.shape == (N,)
    assert jnp.allclose(scores, ref, atol=1e-5, rtol=1e-5)

    # Fused multi-client forward (one launch for the whole round).
    scores_b = jax.block_until_ready(fedrec_forward_batched(user_embs, items_emb))
    ref_b = jnp.stack(
        [fedrec_forward_ref(user_embs[c:c + 1], items_emb) for c in range(C)]
    )
    assert scores_b.shape == (C, N)
    assert jnp.allclose(scores_b, ref_b, atol=1e-5, rtol=1e-5)

    # TODO(synk): train_() (BPR loss/backward/SGD step) and eval_() (host-side
    # rejection sampling + recall/NDCG) are training/eval host logic, not the
    # forward compute, and are not translated here.
    print("KERNEL_OK")
</pallas_src>

<mosaic_0001>
module attributes {stable_mosaic.version = 11 : i64} {
  func.func @_score_kernel(%arg0: i32, %arg1: memref<1x32xf32, #tpu.memory_space<vmem>>, %arg2: memref<128x32xf32, #tpu.memory_space<vmem>>, %arg3: memref<1x128xf32, #tpu.memory_space<vmem>>) attributes {dimension_semantics = [#tpu.dimension_semantics<parallel>], iteration_bounds = array<i64: 1>, scalar_prefetch = 0 : i64, scratch_operands = 0 : i64, tpu.core_type = #tpu.core_type<tc>, window_params = [{pipeline_mode = #tpu.pipeline_mode<synchronous>, transform_indices = @transform_0, window_bounds = array<i64: 1, 32>}, {transform_indices = @transform_1, window_bounds = array<i64: 128, 32>}, {transform_indices = @transform_2, window_bounds = array<i64: 1, 128>}]} {
    %c0 = arith.constant 0 : index
    %c0_0 = arith.constant 0 : index
    %0 = vector.load %arg1[%c0, %c0_0] : memref<1x32xf32, #tpu.memory_space<vmem>>, vector<1x32xf32>
    %c0_1 = arith.constant 0 : index
    %c0_2 = arith.constant 0 : index
    %1 = vector.load %arg2[%c0_1, %c0_2] : memref<128x32xf32, #tpu.memory_space<vmem>>, vector<128x32xf32>
    %cst = arith.constant dense<0.000000e+00> : vector<1x128xf32>
    %2 = tpu.matmul %0, %1, %cst {dimension_numbers = #tpu.dot_dimension_numbers<[1], [1], [0], [0], [0, 0, 1, 0], [], []>} : vector<1x32xf32>, vector<128x32xf32>, vector<1x128xf32> -> vector<1x128xf32>
    %c0_3 = arith.constant 0 : index
    %c0_4 = arith.constant 0 : index
    %3 = vector.load %arg3[%c0_3, %c0_4] : memref<1x128xf32, #tpu.memory_space<vmem>>, vector<1x128xf32>
    tpu.vector_store %arg3[%c0_3, %c0_4], %2 {strides = array<i32>} : memref<1x128xf32, #tpu.memory_space<vmem>>, vector<1x128xf32>,
    return
  }
  func.func @transform_0(%arg0: i32) -> (i32, i32) {
    %c0_i32 = arith.constant 0 : i32
    %c0_i32_0 = arith.constant 0 : i32
    %c0_i32_1 = arith.constant 0 : i32
    return %c0_i32, %c0_i32_0 : i32, i32
  }
  func.func @transform_1(%arg0: i32) -> (i32, i32) {
    %c0_i32 = arith.constant 0 : i32
    %c0_i32_0 = arith.constant 0 : i32
    return %arg0, %c0_i32 : i32, i32
  }
  func.func @transform_2(%arg0: i32) -> (i32, i32) {
    %c0_i32 = arith.constant 0 : i32
    %c0_i32_0 = arith.constant 0 : i32
    return %c0_i32, %arg0 : i32, i32
  }
}

</mosaic_0001>

<llo_original>
// kernel: tpu_custom_call.1
$region0: #{tpu_custom_call.1}
  #allocation0 [shape = 'u32[]', space=smem, size = 0x4, offset = 0x4, fixed_abs, tag = 'smem constant byte address 0x4 - core index']
  #allocation1 [shape = 'u32[144,128]{1,0:T(1,128)}', space=vmem, size = 0x12000, scoped, tag = 'internal scratch']
  %s0 = inlined_call_operand.vmem [shape: f32[1,32], index: 0, kind: input, shape index: {}]
  %s1 = inlined_call_operand.vmem [shape: f32[128,32], index: 1, kind: input, shape index: {}]
  %s2 = inlined_call_operand.hbm [shape: f32[1,128], index: 2, kind: output, shape index: {}]
  %s3 = sld [smem:[#allocation0]]
  $region18: #{tpu_custom_call.1} parent=0
    _
  %s5 = ssub.s32 1, %s3
  %s6 = scalar_select 0, %s5, %s3
  $region1: #{tpu_custom_call.1} parent=0
    #allocation2 [shape = 'u8[512]{0}', space=vmem, size = 0x400, scoped, tag = 'output window, operand 0, single buffered']
    #allocation3 [shape = 's32[1]{0}', space=sflag, size = 0x4, scoped, tag = 'scoped memory for tpu_custom_call.1']
    %7 = vsyncpa [#allocation3], 0
    // Predicated region
    $region2: #{tpu_custom_call.1} parent=1 // pred_check
      _
    $region3: #{tpu_custom_call.1} parent=1 // pred_check_branch
      %9 = sbr.rel (0) target = $region5
    $region4: #{tpu_custom_call.1} parent=1 // pred_region
      _
    $region5: #{tpu_custom_call.1} parent=1 // pred_fallthru
      _
    // Predicated region
    $region6: #{tpu_custom_call.1} parent=1 // pred_check
      _
    $region7: #{tpu_custom_call.1} parent=1 // pred_check_branch
      %11 = sbr.rel (0) target = $region9
    $region8: #{tpu_custom_call.1} parent=1 // pred_region
      _
    $region9: #{tpu_custom_call.1} parent=1 // pred_fallthru
      _
    %v12 = vld [vmem:[%s0] sm:$0x1]
    %v13 = vld [vmem:[%s1] sm:$0xff]
    %v14 = vld [vmem:[%s1 + $0x8] sm:$0xff]
    %v15 = vld [vmem:[%s1 + $0x10] sm:$0xff]
    %v16 = vld [vmem:[%s1 + $0x18] sm:$0xff]
    %v17 = vld [vmem:[%s1 + $0x20] sm:$0xff]
    %v18 = vld [vmem:[%s1 + $0x28] sm:$0xff]
    %v19 = vld [vmem:[%s1 + $0x30] sm:$0xff]
    %v20 = vld [vmem:[%s1 + $0x38] sm:$0xff]
    %v21 = vld [vmem:[%s1 + $0x40] sm:$0xff]
    %v22 = vld [vmem:[%s1 + $0x48] sm:$0xff]
    %v23 = vld [vmem:[%s1 + $0x50] sm:$0xff]
    %v24 = vld [vmem:[%s1 + $0x58] sm:$0xff]
    %v25 = vld [vmem:[%s1 + $0x60] sm:$0xff]
    %v26 = vld [vmem:[%s1 + $0x68] sm:$0xff]
    %v27 = vld [vmem:[%s1 + $0x70] sm:$0xff]
    %v28 = vld [vmem:[%s1 + $0x78] sm:$0xff]
    %vm29 = vcmask 261120
    %v31 = vsel %vm29, %v12, 0
    %v34 = vsel %vm29, %v13, 0
    %v37 = vsel %vm29, %v14, 0
    %v40 = vsel %vm29, %v15, 0
    %v43 = vsel %vm29, %v16, 0
    %v46 = vsel %vm29, %v17, 0
    %v49 = vsel %vm29, %v18, 0
    %v52 = vsel %vm29, %v19, 0
    %v55 = vsel %vm29, %v20, 0
    %v58 = vsel %vm29, %v21, 0
    %v61 = vsel %vm29, %v22, 0
    %v64 = vsel %vm29, %v23, 0
    %v67 = vsel %vm29, %v24, 0
    %v70 = vsel %vm29, %v25, 0
    %v73 = vsel %vm29, %v26, 0
    %v76 = vsel %vm29, %v27, 0
    %v79 = vsel %vm29, %v28, 0
    %81 = vmatprep.subr.mxu0 0.0
    %82 = vmatpush1.xpose.msra.mxu0 %v34
    %83 = vmatprep.subr.mxu0 0.0
    %84 = vmatpush1.xpose.msra.mxu0 %v37
    %85 = vmatprep.subr.mxu0 0.0
    %86 = vmatpush1.xpose.msra.mxu0 %v40
    %87 = vmatprep.subr.mxu0 0.0
    %88 = vmatpush1.xpose.msra.mxu0 %v43
    %89 = vmatprep.subr.mxu0 0.0
    %90 = vmatpush1.xpose.msra.mxu0 %v46
    %91 = vmatprep.subr.mxu0 0.0
    %92 = vmatpush1.xpose.msra.mxu0 %v49
    %93 = vmatprep.subr.mxu0 0.0
    %94 = vmatpush1.xpose.msra.mxu0 %v52
    %95 = vmatprep.subr.mxu0 0.0
    %96 = vmatpush1.xpose.msra.mxu0 %v55
    %97 = vmatprep.subr.mxu0 0.0
    %98 = vmatpush1.xpose.msra.mxu0 %v58
    %99 = vmatprep.subr.mxu0 0.0
    %100 = vmatpush1.xpose.msra.mxu0 %v61
    %101 = vmatprep.subr.mxu0 0.0
    %102 = vmatpush1.xpose.msra.mxu0 %v64
    %103 = vmatprep.subr.mxu0 0.0
    %104 = vmatpush1.xpose.msra.mxu0 %v67
    %105 = vmatprep.subr.mxu0 0.0
    %106 = vmatpush1.xpose.msra.mxu0 %v70
    %107 = vmatprep.subr.mxu0 0.0
    %108 = vmatpush1.xpose.msra.mxu0 %v73
    %109 = vmatprep.subr.mxu0 0.0
    %110 = vmatpush1.xpose.msra.mxu0 %v76
    %111 = vmatprep.subr.mxu0 0.0
    %112 = vmatpush1.xpose.msra.mxu0 %v79
    %113 = vmatprep.subr.mxu0 0.0
    %114 = vmatpush1.xpose.msra.mxu0 0.0
    %115 = vmatprep.subr.mxu0 0.0
    %116 = vmatpush1.xpose.msra.mxu0 0.0
    %117 = vmatprep.subr.mxu0 0.0
    %118 = vmatpush1.xpose.msra.mxu0 0.0
    %119 = vmatprep.subr.mxu0 0.0
    %120 = vmatpush1.xpose.msra.mxu0 0.0
    %121 = vmatprep.subr.mxu0 0.0
    %122 = vmatpush1.xpose.msra.mxu0 0.0
    %123 = vmatprep.subr.mxu0 0.0
    %124 = vmatpush1.xpose.msra.mxu0 0.0
    %125 = vmatprep.subr.mxu0 0.0
    %126 = vmatpush1.xpose.msra.mxu0 0.0
    %127 = vmatprep.subr.mxu0 0.0
    %128 = vmatpush1.xpose.msra.mxu0 0.0
    %129 = vmatprep.subr.mxu0 0.0
    %130 = vmatpush1.xpose.msra.mxu0 0.0
    %131 = vmatprep.subr.mxu0 0.0
    %132 = vmatpush1.xpose.msra.mxu0 0.0
    %133 = vmatprep.subr.mxu0 0.0
    %134 = vmatpush1.xpose.msra.mxu0 0.0
    %135 = vmatprep.subr.mxu0 0.0
    %136 = vmatpush1.xpose.msra.mxu0 0.0
    %137 = vmatprep.subr.mxu0 0.0
    %138 = vmatpush1.xpose.msra.mxu0 0.0
    %139 = vmatprep.subr.mxu0 0.0
    %140 = vmatpush1.xpose.msra.mxu0 0.0
    %141 = vmatprep.subr.mxu0 0.0
    %142 = vmatpush1.xpose.msra.mxu0 0.0
    %143 = vmatprep.subr.mxu0 0.0
    %144 = vmatpush1.xpose.msra.mxu0 0.0
    %145 = vmatprep.mubr.f32.mxu0 0.0
    %146 = vmatmul.mubr.f32.gmra.mrb[0].mxu0 %v31
    %v147 = vpop.f32.mrb[0].mxu0
    %v148 = vadd.f32 0.0, %v147
    %v149 = vpop.f32.mrb[0].mxu0
    %150 = vdwg.mxu0
    %151 = vst [vmem:[#allocation2] sm:$0x1] %v148
    // Predicated region
    $region10: #{tpu_custom_call.1} parent=1 // pred_check
      _
    $region11: #{tpu_custom_call.1} parent=1 // pred_check_branch
      %153 = sbr.rel (0) target = $region13
    $region12: #{tpu_custom_call.1} parent=1 // pred_region
      %s155 = ssub.s32 16, 16
      %156 = vsyncadd [#allocation3], %s155
      %s158 = sshll.u32 [#allocation2], 4
      %s159 = int_to_ptr.vmem [resolvable:$true] %s158
      %161 = dma.vmem_to_hbm [thread:$0]  %s159, 16, %s2, [#allocation3]
    $region13: #{tpu_custom_call.1} parent=1 // pred_fallthru
      _
    // Predicated region
    $region14: #{tpu_custom_call.1} parent=1 // pred_check
      _
    $region15: #{tpu_custom_call.1} parent=1 // pred_check_branch
      %163 = sbr.rel (0) target = $region17
    $region16: #{tpu_custom_call.1} parent=1 // pred_region
      %164 = dma.done [#allocation3], 16
    $region17: #{tpu_custom_call.1} parent=1 // pred_fallthru
      _
    %165 = vsyncpa [#allocation3], 1

</llo_original>
